<compile_context>
chip_gen: v6e
topology: v6e:2x2x1
jax: 0.10.0
libtpu: 0.0.40
codegen_flags: <defaults>
</compile_context>

<pallas_src>
import math

import jax
import jax.numpy as jnp
from jax.experimental import pallas as pl
from jax.experimental.pallas import tpu as pltpu


def _level_params(H, W, pool_size):
    """Static per-level geometry matching the PyTorch module (integer padding)."""
    levels = []
    for n in pool_size:
        kh = int(math.ceil(H / n))
        kw = int(math.ceil(W / n))
        h_pad = (kh * n - H + 1) // 2
        w_pad = (kw * n - W + 1) // 2
        out_h = (H + 2 * h_pad - kh) // kh + 1
        out_w = (W + 2 * w_pad - kw) // kw + 1
        if out_h != n or out_w != n:
            raise ValueError(
                f"SPP level {n}: MaxPool2d output ({out_h},{out_w}) != ({n},{n})")
        for i in range(n):
            if min(H, (i + 1) * kh - h_pad) <= max(0, i * kh - h_pad):
                raise ValueError(f"SPP level {n}: empty row window {i}")
        for j in range(n):
            if min(W, (j + 1) * kw - w_pad) <= max(0, j * kw - w_pad):
                raise ValueError(f"SPP level {n}: empty col window {j}")
        levels.append((n, kh, kw, h_pad, w_pad))
    return tuple(levels)


def _ceil_to(x, m):
    return -(-x // m) * m


def _vmem_capacity_bytes():
    """Generation-aware VMEM capacity; conservative fallback = v7x's 64 MiB/TC."""
    try:
        return int(pltpu.get_tpu_info().vmem_capacity_bytes)
    except Exception:
        return 64 << 20


def _block_vmem_bytes(ct, H, W, levels, itemsize):
    """Padded VMEM footprint of one grid step's input + output blocks."""
    in_b = ct * _ceil_to(H, 8) * _ceil_to(W, 128) * itemsize
    out_b = sum(_ceil_to(ct, 8) * _ceil_to(n * n, 128) * itemsize
                for (n, *_r) in levels)
    return in_b + out_b


def _pick_channel_tile(C, B, H, W, levels, itemsize, block_budget):
    """Largest channel tile whose double-buffered blocks fit the VMEM budget.

    Ct must be a divisor of C and (Ct == C or Ct % 8 == 0) so the (1, Ct, n*n)
    output blocks satisfy the sublane tiling rule.  Also force >= 2 grid steps
    (v7x has 2 TensorCores; the extra step costs ~0.35us on v5e/v6e).
    """
    cands = sorted({d for d in range(1, C + 1)
                    if C % d == 0 and (d == C or d % 8 == 0)}, reverse=True)

    def fits(d):
        return 2 * _block_vmem_bytes(d, H, W, levels, itemsize) <= block_budget

    fitting = [d for d in cands if fits(d)]
    ct = fitting[0] if fitting else cands[-1]
    if B * (C // ct) < 2:
        halves = [d for d in cands if d <= C // 2 and fits(d)]
        if halves:
            ct = halves[0]
    return ct


def _make_spp_kernel(levels, H, W):
    """Fused kernel: (1, Ct, H, W) NCHW block -> one (1, Ct, n*n) block per level."""

    def kernel(x_ref, *out_refs):
        for (n, kh, kw, h_pad, w_pad), o_ref in zip(levels, out_refs):
            pieces = []
            for i in range(n):
                rs = max(0, i * kh - h_pad)
                re = min(H, (i + 1) * kh - h_pad)
                # Row-band max over full (lane-aligned) rows first: one sublane
                # reduce per band; bands partition H, so ~1 pass per level.
                band = jnp.max(x_ref[0, :, rs:re, :], axis=1)          # (Ct, W)
                for j in range(n):
                    cs = max(0, j * kw - w_pad)
                    ce = min(W, (j + 1) * kw - w_pad)
                    # Clamped-window max == -inf padded MaxPool2d max.
                    pieces.append(
                        jnp.max(band[:, cs:ce], axis=-1, keepdims=True))  # (Ct,1)
            lvl = pieces[0] if len(pieces) == 1 else jnp.concatenate(pieces, axis=-1)
            # Single block store per level (no per-element masked stores).
            o_ref[...] = lvl[None].astype(o_ref.dtype)                  # (1,Ct,n*n)

    return kernel


def spp_layer(x_nchw, pool_size=(1, 2, 4)):
    """Spatial Pyramid Pooling. x_nchw: (B, C, H, W) -> (B, C * sum(n^2))."""
    B, C, H, W = x_nchw.shape
    levels = _level_params(H, W, pool_size)
    itemsize = jnp.dtype(x_nchw.dtype).itemsize

    vmem_cap = _vmem_capacity_bytes()
    block_budget = int(0.6 * vmem_cap)        # double-buffered blocks + headroom
    Ct = _pick_channel_tile(C, B, H, W, levels, itemsize, block_budget)
    n_cblocks = C // Ct

    needed = 2 * _block_vmem_bytes(Ct, H, W, levels, itemsize)
    vmem_limit = int(min(vmem_cap, max(int(0.75 * vmem_cap), int(1.25 * needed))))

    out_shapes = tuple(jax.ShapeDtypeStruct((B, C, n * n), x_nchw.dtype)
                       for (n, *_r) in levels)
    out_specs = tuple(pl.BlockSpec((1, Ct, n * n), lambda b, c: (b, c, 0))
                      for (n, *_r) in levels)

    out_elems = B * C * sum(n * n for (n, *_r) in levels)
    cost = pl.CostEstimate(
        flops=B * C * H * W * len(levels),
        transcendentals=0,
        bytes_accessed=(B * C * H * W + out_elems) * itemsize)

    pooled = pl.pallas_call(
        _make_spp_kernel(levels, H, W),
        out_shape=out_shapes,
        grid=(B, n_cblocks),
        in_specs=[pl.BlockSpec((1, Ct, H, W), lambda b, c: (b, c, 0, 0))],
        out_specs=out_specs,
        compiler_params=pltpu.CompilerParams(
            dimension_semantics=("parallel", "parallel"),
            vmem_limit_bytes=vmem_limit),
        cost_estimate=cost,
    )(x_nchw)

    # Free reshapes (adjacent-dim merges) + one tiny concat: flatten order already
    # matches PyTorch's NCHW .view(B, -1); no transposes anywhere.
    outs = [p.reshape(B, C * n * n) for (n, *_r), p in zip(levels, pooled)]
    return jnp.concatenate(outs, axis=1)


def _reference_spp(x_nchw, pool_size):
    """Pure-JAX reference with the same clamped-window (== -inf padded) semantics."""
    B, C, H, W = x_nchw.shape
    outs = []
    for (n, kh, kw, h_pad, w_pad) in _level_params(H, W, pool_size):
        rows = []
        for i in range(n):
            rs, re = max(0, i * kh - h_pad), min(H, (i + 1) * kh - h_pad)
            cols = []
            for j in range(n):
                cs, ce = max(0, j * kw - w_pad), min(W, (j + 1) * kw - w_pad)
                cols.append(jnp.max(x_nchw[:, :, rs:re, cs:ce], axis=(2, 3)))
            rows.append(jnp.stack(cols, axis=-1))
        pooled = jnp.stack(rows, axis=-2)  # (B, C, n, n)
        outs.append(pooled.reshape(B, -1))
    return jnp.concatenate(outs, axis=1)


if __name__ == "__main__":
    # Primary check: module-scale shapes (SPPLayer has no learned parameters).
    pool_size = (1, 2, 4)
    B, C, H, W = 2, 4, 16, 16
    x = jax.random.normal(jax.random.PRNGKey(0), (B, C, H, W), dtype=jnp.float32)

    out = jax.jit(lambda a: spp_layer(a, pool_size))(x)
    out = jax.block_until_ready(out)
    assert out.shape == (B, C * sum(n * n for n in pool_size)), out.shape
    assert jnp.allclose(out, _reference_spp(x, pool_size)), "mismatch (even-division case)"

    # Secondary check: non-dividing level -> in-kernel boundary clamping, larger C.
    x2 = jax.random.normal(jax.random.PRNGKey(1), (2, 1024, 14, 14), dtype=jnp.float32)
    out2 = jax.jit(lambda a: spp_layer(a, (1, 2, 3)))(x2)
    out2 = jax.block_until_ready(out2)
    assert out2.shape == (2, 1024 * (1 + 4 + 9)), out2.shape
    assert jnp.allclose(out2, _reference_spp(x2, (1, 2, 3))), "mismatch (padded case)"

    # Third check: B == 1 forces the >=2-grid-step channel split (v7x 2-TC path).
    x3 = jax.random.normal(jax.random.PRNGKey(2), (1, 256, 16, 16), dtype=jnp.float32)
    out3 = jax.jit(lambda a: spp_layer(a, pool_size))(x3)
    out3 = jax.block_until_ready(out3)
    assert out3.shape == (1, 256 * sum(n * n for n in pool_size)), out3.shape
    assert jnp.allclose(out3, _reference_spp(x3, pool_size)), "mismatch (tiled case)"

    print("KERNEL_OK")
</pallas_src>

<mosaic_0001>
module attributes {stable_mosaic.version = 11 : i64} {
  func.func @kernel(%arg0: i32, %arg1: i32, %arg2: memref<1x4x16x16xf32, #tpu.memory_space<vmem>>, %arg3: memref<1x4x1xf32, #tpu.memory_space<vmem>>, %arg4: memref<1x4x4xf32, #tpu.memory_space<vmem>>, %arg5: memref<1x4x16xf32, #tpu.memory_space<vmem>>) attributes {dimension_semantics = [#tpu.dimension_semantics<parallel>, #tpu.dimension_semantics<parallel>], iteration_bounds = array<i64: 2, 1>, scalar_prefetch = 0 : i64, scratch_operands = 0 : i64, tpu.core_type = #tpu.core_type<tc>, window_params = [{transform_indices = @transform_0, window_bounds = array<i64: 1, 4, 16, 16>}, {transform_indices = @transform_1, window_bounds = array<i64: 1, 4, 1>}, {transform_indices = @transform_2, window_bounds = array<i64: 1, 4, 4>}, {transform_indices = @transform_3, window_bounds = array<i64: 1, 4, 16>}]} {
    %c0 = arith.constant 0 : index
    %c0_0 = arith.constant 0 : index
    %c0_1 = arith.constant 0 : index
    %c0_2 = arith.constant 0 : index
    %0 = vector.load %arg2[%c0, %c0_0, %c0_1, %c0_2] : memref<1x4x16x16xf32, #tpu.memory_space<vmem>>, vector<1x4x16x16xf32>
    %1 = vector.shape_cast %0 : vector<1x4x16x16xf32> to vector<4x16x16xf32>
    %cst = arith.constant dense<0xFF800000> : vector<4x16xf32>
    %2 = vector.multi_reduction <maximumf>, %1, %cst [1] : vector<4x16x16xf32> to vector<4x16xf32>
    %cst_3 = arith.constant dense<0xFF800000> : vector<4xf32>
    %3 = vector.multi_reduction <maximumf>, %2, %cst_3 [1] : vector<4x16xf32> to vector<4xf32>
    %4 = vector.shape_cast %3 : vector<4xf32> to vector<4x1xf32>
    %5 = vector.shape_cast %4 : vector<4x1xf32> to vector<1x4x1xf32>
    %c0_4 = arith.constant 0 : index
    %c0_5 = arith.constant 0 : index
    %c0_6 = arith.constant 0 : index
    %6 = vector.load %arg3[%c0_4, %c0_5, %c0_6] : memref<1x4x1xf32, #tpu.memory_space<vmem>>, vector<1x4x1xf32>
    tpu.vector_store %arg3[%c0_4, %c0_5, %c0_6], %5 {strides = array<i32>} : memref<1x4x1xf32, #tpu.memory_space<vmem>>, vector<1x4x1xf32>,
    %c0_7 = arith.constant 0 : index
    %c0_8 = arith.constant 0 : index
    %c0_9 = arith.constant 0 : index
    %c0_10 = arith.constant 0 : index
    %7 = vector.load %arg2[%c0_7, %c0_8, %c0_9, %c0_10] : memref<1x4x16x16xf32, #tpu.memory_space<vmem>>, vector<1x4x8x16xf32>
    %8 = vector.shape_cast %7 : vector<1x4x8x16xf32> to vector<4x8x16xf32>
    %cst_11 = arith.constant dense<0xFF800000> : vector<4x16xf32>
    %9 = vector.multi_reduction <maximumf>, %8, %cst_11 [1] : vector<4x8x16xf32> to vector<4x16xf32>
    %10 = vector.extract_strided_slice %9 {offsets = [0, 0], sizes = [4, 8], strides = [1, 1]} : vector<4x16xf32> to vector<4x8xf32>
    %cst_12 = arith.constant dense<0xFF800000> : vector<4xf32>
    %11 = vector.multi_reduction <maximumf>, %10, %cst_12 [1] : vector<4x8xf32> to vector<4xf32>
    %12 = vector.shape_cast %11 : vector<4xf32> to vector<4x1xf32>
    %13 = vector.extract_strided_slice %9 {offsets = [0, 8], sizes = [4, 8], strides = [1, 1]} : vector<4x16xf32> to vector<4x8xf32>
    %cst_13 = arith.constant dense<0xFF800000> : vector<4xf32>
    %14 = vector.multi_reduction <maximumf>, %13, %cst_13 [1] : vector<4x8xf32> to vector<4xf32>
    %15 = vector.shape_cast %14 : vector<4xf32> to vector<4x1xf32>
    %c0_14 = arith.constant 0 : index
    %c0_15 = arith.constant 0 : index
    %c8 = arith.constant 8 : index
    %c0_16 = arith.constant 0 : index
    %16 = vector.load %arg2[%c0_14, %c0_15, %c8, %c0_16] : memref<1x4x16x16xf32, #tpu.memory_space<vmem>>, vector<1x4x8x16xf32>
    %17 = vector.shape_cast %16 : vector<1x4x8x16xf32> to vector<4x8x16xf32>
    %cst_17 = arith.constant dense<0xFF800000> : vector<4x16xf32>
    %18 = vector.multi_reduction <maximumf>, %17, %cst_17 [1] : vector<4x8x16xf32> to vector<4x16xf32>
    %19 = vector.extract_strided_slice %18 {offsets = [0, 0], sizes = [4, 8], strides = [1, 1]} : vector<4x16xf32> to vector<4x8xf32>
    %cst_18 = arith.constant dense<0xFF800000> : vector<4xf32>
    %20 = vector.multi_reduction <maximumf>, %19, %cst_18 [1] : vector<4x8xf32> to vector<4xf32>
    %21 = vector.shape_cast %20 : vector<4xf32> to vector<4x1xf32>
    %22 = vector.extract_strided_slice %18 {offsets = [0, 8], sizes = [4, 8], strides = [1, 1]} : vector<4x16xf32> to vector<4x8xf32>
    %cst_19 = arith.constant dense<0xFF800000> : vector<4xf32>
    %23 = vector.multi_reduction <maximumf>, %22, %cst_19 [1] : vector<4x8xf32> to vector<4xf32>
    %24 = vector.shape_cast %23 : vector<4xf32> to vector<4x1xf32>
    %25 = tpu.concatenate %12, %15, %21, %24 in 1 : vector<4x1xf32>, vector<4x1xf32>, vector<4x1xf32>, vector<4x1xf32> -> vector<4x4xf32>
    %26 = vector.shape_cast %25 : vector<4x4xf32> to vector<1x4x4xf32>
    %c0_20 = arith.constant 0 : index
    %c0_21 = arith.constant 0 : index
    %c0_22 = arith.constant 0 : index
    %27 = vector.load %arg4[%c0_20, %c0_21, %c0_22] : memref<1x4x4xf32, #tpu.memory_space<vmem>>, vector<1x4x4xf32>
    tpu.vector_store %arg4[%c0_20, %c0_21, %c0_22], %26 {strides = array<i32>} : memref<1x4x4xf32, #tpu.memory_space<vmem>>, vector<1x4x4xf32>,
    %c0_23 = arith.constant 0 : index
    %c0_24 = arith.constant 0 : index
    %c0_25 = arith.constant 0 : index
    %c0_26 = arith.constant 0 : index
    %28 = vector.load %arg2[%c0_23, %c0_24, %c0_25, %c0_26] : memref<1x4x16x16xf32, #tpu.memory_space<vmem>>, vector<1x4x4x16xf32>
    %29 = vector.shape_cast %28 : vector<1x4x4x16xf32> to vector<4x4x16xf32>
    %cst_27 = arith.constant dense<0xFF800000> : vector<4x16xf32>
    %30 = vector.multi_reduction <maximumf>, %29, %cst_27 [1] : vector<4x4x16xf32> to vector<4x16xf32>
    %31 = vector.extract_strided_slice %30 {offsets = [0, 0], sizes = [4, 4], strides = [1, 1]} : vector<4x16xf32> to vector<4x4xf32>
    %cst_28 = arith.constant dense<0xFF800000> : vector<4xf32>
    %32 = vector.multi_reduction <maximumf>, %31, %cst_28 [1] : vector<4x4xf32> to vector<4xf32>
    %33 = vector.shape_cast %32 : vector<4xf32> to vector<4x1xf32>
    %34 = vector.extract_strided_slice %30 {offsets = [0, 4], sizes = [4, 4], strides = [1, 1]} : vector<4x16xf32> to vector<4x4xf32>
    %cst_29 = arith.constant dense<0xFF800000> : vector<4xf32>
    %35 = vector.multi_reduction <maximumf>, %34, %cst_29 [1] : vector<4x4xf32> to vector<4xf32>
    %36 = vector.shape_cast %35 : vector<4xf32> to vector<4x1xf32>
    %37 = vector.extract_strided_slice %30 {offsets = [0, 8], sizes = [4, 4], strides = [1, 1]} : vector<4x16xf32> to vector<4x4xf32>
    %cst_30 = arith.constant dense<0xFF800000> : vector<4xf32>
    %38 = vector.multi_reduction <maximumf>, %37, %cst_30 [1] : vector<4x4xf32> to vector<4xf32>
    %39 = vector.shape_cast %38 : vector<4xf32> to vector<4x1xf32>
    %40 = vector.extract_strided_slice %30 {offsets = [0, 12], sizes = [4, 4], strides = [1, 1]} : vector<4x16xf32> to vector<4x4xf32>
    %cst_31 = arith.constant dense<0xFF800000> : vector<4xf32>
    %41 = vector.multi_reduction <maximumf>, %40, %cst_31 [1] : vector<4x4xf32> to vector<4xf32>
    %42 = vector.shape_cast %41 : vector<4xf32> to vector<4x1xf32>
    %c0_32 = arith.constant 0 : index
    %c0_33 = arith.constant 0 : index
    %c4 = arith.constant 4 : index
    %c0_34 = arith.constant 0 : index
    %43 = vector.load %arg2[%c0_32, %c0_33, %c4, %c0_34] : memref<1x4x16x16xf32, #tpu.memory_space<vmem>>, vector<1x4x4x16xf32>
    %44 = vector.shape_cast %43 : vector<1x4x4x16xf32> to vector<4x4x16xf32>
    %cst_35 = arith.constant dense<0xFF800000> : vector<4x16xf32>
    %45 = vector.multi_reduction <maximumf>, %44, %cst_35 [1] : vector<4x4x16xf32> to vector<4x16xf32>
    %46 = vector.extract_strided_slice %45 {offsets = [0, 0], sizes = [4, 4], strides = [1, 1]} : vector<4x16xf32> to vector<4x4xf32>
    %cst_36 = arith.constant dense<0xFF800000> : vector<4xf32>
    %47 = vector.multi_reduction <maximumf>, %46, %cst_36 [1] : vector<4x4xf32> to vector<4xf32>
    %48 = vector.shape_cast %47 : vector<4xf32> to vector<4x1xf32>
    %49 = vector.extract_strided_slice %45 {offsets = [0, 4], sizes = [4, 4], strides = [1, 1]} : vector<4x16xf32> to vector<4x4xf32>
    %cst_37 = arith.constant dense<0xFF800000> : vector<4xf32>
    %50 = vector.multi_reduction <maximumf>, %49, %cst_37 [1] : vector<4x4xf32> to vector<4xf32>
    %51 = vector.shape_cast %50 : vector<4xf32> to vector<4x1xf32>
    %52 = vector.extract_strided_slice %45 {offsets = [0, 8], sizes = [4, 4], strides = [1, 1]} : vector<4x16xf32> to vector<4x4xf32>
    %cst_38 = arith.constant dense<0xFF800000> : vector<4xf32>
    %53 = vector.multi_reduction <maximumf>, %52, %cst_38 [1] : vector<4x4xf32> to vector<4xf32>
    %54 = vector.shape_cast %53 : vector<4xf32> to vector<4x1xf32>
    %55 = vector.extract_strided_slice %45 {offsets = [0, 12], sizes = [4, 4], strides = [1, 1]} : vector<4x16xf32> to vector<4x4xf32>
    %cst_39 = arith.constant dense<0xFF800000> : vector<4xf32>
    %56 = vector.multi_reduction <maximumf>, %55, %cst_39 [1] : vector<4x4xf32> to vector<4xf32>
    %57 = vector.shape_cast %56 : vector<4xf32> to vector<4x1xf32>
    %c0_40 = arith.constant 0 : index
    %c0_41 = arith.constant 0 : index
    %c8_42 = arith.constant 8 : index
    %c0_43 = arith.constant 0 : index
    %58 = vector.load %arg2[%c0_40, %c0_41, %c8_42, %c0_43] : memref<1x4x16x16xf32, #tpu.memory_space<vmem>>, vector<1x4x4x16xf32>
    %59 = vector.shape_cast %58 : vector<1x4x4x16xf32> to vector<4x4x16xf32>
    %cst_44 = arith.constant dense<0xFF800000> : vector<4x16xf32>
    %60 = vector.multi_reduction <maximumf>, %59, %cst_44 [1] : vector<4x4x16xf32> to vector<4x16xf32>
    %61 = vector.extract_strided_slice %60 {offsets = [0, 0], sizes = [4, 4], strides = [1, 1]} : vector<4x16xf32> to vector<4x4xf32>
    %cst_45 = arith.constant dense<0xFF800000> : vector<4xf32>
    %62 = vector.multi_reduction <maximumf>, %61, %cst_45 [1] : vector<4x4xf32> to vector<4xf32>
    %63 = vector.shape_cast %62 : vector<4xf32> to vector<4x1xf32>
    %64 = vector.extract_strided_slice %60 {offsets = [0, 4], sizes = [4, 4], strides = [1, 1]} : vector<4x16xf32> to vector<4x4xf32>
    %cst_46 = arith.constant dense<0xFF800000> : vector<4xf32>
    %65 = vector.multi_reduction <maximumf>, %64, %cst_46 [1] : vector<4x4xf32> to vector<4xf32>
    %66 = vector.shape_cast %65 : vector<4xf32> to vector<4x1xf32>
    %67 = vector.extract_strided_slice %60 {offsets = [0, 8], sizes = [4, 4], strides = [1, 1]} : vector<4x16xf32> to vector<4x4xf32>
    %cst_47 = arith.constant dense<0xFF800000> : vector<4xf32>
    %68 = vector.multi_reduction <maximumf>, %67, %cst_47 [1] : vector<4x4xf32> to vector<4xf32>
    %69 = vector.shape_cast %68 : vector<4xf32> to vector<4x1xf32>
    %70 = vector.extract_strided_slice %60 {offsets = [0, 12], sizes = [4, 4], strides = [1, 1]} : vector<4x16xf32> to vector<4x4xf32>
    %cst_48 = arith.constant dense<0xFF800000> : vector<4xf32>
    %71 = vector.multi_reduction <maximumf>, %70, %cst_48 [1] : vector<4x4xf32> to vector<4xf32>
    %72 = vector.shape_cast %71 : vector<4xf32> to vector<4x1xf32>
    %c0_49 = arith.constant 0 : index
    %c0_50 = arith.constant 0 : index
    %c12 = arith.constant 12 : index
    %c0_51 = arith.constant 0 : index
    %73 = vector.load %arg2[%c0_49, %c0_50, %c12, %c0_51] : memref<1x4x16x16xf32, #tpu.memory_space<vmem>>, vector<1x4x4x16xf32>
    %74 = vector.shape_cast %73 : vector<1x4x4x16xf32> to vector<4x4x16xf32>
    %cst_52 = arith.constant dense<0xFF800000> : vector<4x16xf32>
    %75 = vector.multi_reduction <maximumf>, %74, %cst_52 [1] : vector<4x4x16xf32> to vector<4x16xf32>
    %76 = vector.extract_strided_slice %75 {offsets = [0, 0], sizes = [4, 4], strides = [1, 1]} : vector<4x16xf32> to vector<4x4xf32>
    %cst_53 = arith.constant dense<0xFF800000> : vector<4xf32>
    %77 = vector.multi_reduction <maximumf>, %76, %cst_53 [1] : vector<4x4xf32> to vector<4xf32>
    %78 = vector.shape_cast %77 : vector<4xf32> to vector<4x1xf32>
    %79 = vector.extract_strided_slice %75 {offsets = [0, 4], sizes = [4, 4], strides = [1, 1]} : vector<4x16xf32> to vector<4x4xf32>
    %cst_54 = arith.constant dense<0xFF800000> : vector<4xf32>
    %80 = vector.multi_reduction <maximumf>, %79, %cst_54 [1] : vector<4x4xf32> to vector<4xf32>
    %81 = vector.shape_cast %80 : vector<4xf32> to vector<4x1xf32>
    %82 = vector.extract_strided_slice %75 {offsets = [0, 8], sizes = [4, 4], strides = [1, 1]} : vector<4x16xf32> to vector<4x4xf32>
    %cst_55 = arith.constant dense<0xFF800000> : vector<4xf32>
    %83 = vector.multi_reduction <maximumf>, %82, %cst_55 [1] : vector<4x4xf32> to vector<4xf32>
    %84 = vector.shape_cast %83 : vector<4xf32> to vector<4x1xf32>
    %85 = vector.extract_strided_slice %75 {offsets = [0, 12], sizes = [4, 4], strides = [1, 1]} : vector<4x16xf32> to vector<4x4xf32>
    %cst_56 = arith.constant dense<0xFF800000> : vector<4xf32>
    %86 = vector.multi_reduction <maximumf>, %85, %cst_56 [1] : vector<4x4xf32> to vector<4xf32>
    %87 = vector.shape_cast %86 : vector<4xf32> to vector<4x1xf32>
    %88 = tpu.concatenate %33, %36, %39, %42, %48, %51, %54, %57, %63, %66, %69, %72, %78, %81, %84, %87 in 1 : vector<4x1xf32>, vector<4x1xf32>, vector<4x1xf32>, vector<4x1xf32>, vector<4x1xf32>, vector<4x1xf32>, vector<4x1xf32>, vector<4x1xf32>, vector<4x1xf32>, vector<4x1xf32>, vector<4x1xf32>, vector<4x1xf32>, vector<4x1xf32>, vector<4x1xf32>, vector<4x1xf32>, vector<4x1xf32> -> vector<4x16xf32>
    %89 = vector.shape_cast %88 : vector<4x16xf32> to vector<1x4x16xf32>
    %c0_57 = arith.constant 0 : index
    %c0_58 = arith.constant 0 : index
    %c0_59 = arith.constant 0 : index
    %90 = vector.load %arg5[%c0_57, %c0_58, %c0_59] : memref<1x4x16xf32, #tpu.memory_space<vmem>>, vector<1x4x16xf32>
    tpu.vector_store %arg5[%c0_57, %c0_58, %c0_59], %89 {strides = array<i32>} : memref<1x4x16xf32, #tpu.memory_space<vmem>>, vector<1x4x16xf32>,
    return
  }
  func.func @transform_0(%arg0: i32, %arg1: i32) -> (i32, i32, i32, i32) {
    %c0_i32 = arith.constant 0 : i32
    %c0_i32_0 = arith.constant 0 : i32
    %c0_i32_1 = arith.constant 0 : i32
    return %arg0, %arg1, %c0_i32, %c0_i32_0 : i32, i32, i32, i32
  }
  func.func @transform_1(%arg0: i32, %arg1: i32) -> (i32, i32, i32) {
    %c0_i32 = arith.constant 0 : i32
    %c0_i32_0 = arith.constant 0 : i32
    return %arg0, %arg1, %c0_i32 : i32, i32, i32
  }
  func.func @transform_2(%arg0: i32, %arg1: i32) -> (i32, i32, i32) {
    %c0_i32 = arith.constant 0 : i32
    %c0_i32_0 = arith.constant 0 : i32
    return %arg0, %arg1, %c0_i32 : i32, i32, i32
  }
  func.func @transform_3(%arg0: i32, %arg1: i32) -> (i32, i32, i32) {
    %c0_i32 = arith.constant 0 : i32
    %c0_i32_0 = arith.constant 0 : i32
    return %arg0, %arg1, %c0_i32 : i32, i32, i32
  }
}

</mosaic_0001>

<llo_original>
// kernel: _lambda_.1
$region0: #{_lambda_.1}
  #allocation0 [shape = 'u32[]', space=smem, size = 0x4, offset = 0x4, fixed_abs, tag = 'smem constant byte address 0x4 - core index']
  #allocation1 [shape = 'u32[144,128]{1,0:T(1,128)}', space=vmem, size = 0x12000, scoped, tag = 'internal scratch']
  %s0 = inlined_call_operand.hbm [shape: f32[2,4,16,16], index: 0, kind: input, shape index: {}]
  %s1 = inlined_call_operand.vmem [shape: f32[2,4,1], index: 1, kind: output, shape index: {0}]
  %s2 = inlined_call_operand.vmem [shape: f32[2,4,4], index: 2, kind: output, shape index: {1}]
  %s3 = inlined_call_operand.vmem [shape: f32[2,4,16], index: 3, kind: output, shape index: {2}]
  %4 = xla_tuple %s1, %s2, %s3
  %s5 = sld [smem:[#allocation0]]
  $region57: #{_lambda_.1} parent=0
    _
  %s7 = ssub.s32 1, %s5
  %s8 = scalar_select 0, %s7, %s5
  $region1: #{_lambda_.1} parent=0
    #allocation2 [shape = 'u8[65536]{0}', space=vmem, size = 0x10000, scoped, tag = 'input window, operand 0']
    #allocation3 [shape = 's32[2]{0}', space=sflag, size = 0x8, scoped, tag = 'scoped memory for _lambda_.1']
    %9 = vsyncpa [#allocation3], 0
    %s10 = scalar_lea.sflag [#allocation3], 1
    %11 = vsyncpa %s10, 0
    loop: start=0, step=1, limit=4
    $region2: #{_lambda_.1} parent=1 // loop_pre_header
      _
    $region3: #{_lambda_.1} parent=1 // loop_header
      %s13 = sphi 0, %s17
      %p14 = scmp.ge.s32.totalorder %s13, 4
      %s20 = sphi 0, %s32
      %s21 = sphi 0, %s28
      %s22 = sphi 0, %s20
      %s23 = sphi 0, %s21
      %s24 = sphi 0, %s22
      %s25 = sphi 0, %s23
      %s37 = sphi 0, %s39
      %s40 = sphi 0, %s37
      %s41 = sphi 0, %s40
      %s57 = sphi 0, %s41
      %s65 = sphi 0, %s67
      %s68 = sphi 0, %s65
      %s69 = sphi 0, %s68
      %s85 = sphi 0, %s69
      %s93 = sphi 0, %s95
      %s96 = sphi 0, %s93
      %s97 = sphi 0, %s96
      %s113 = sphi 0, %s97
      %s121 = sphi 0, %s123
      %s124 = sphi 0, %s121
      %s125 = sphi 0, %s124
      %s141 = sphi 0, %s125
    $region4: #{_lambda_.1} parent=1 // loop_header_branch
      %16 = sbr.rel (%p14) target = $region8
    $region5: #{_lambda_.1} parent=1 // loop_body
      %s18 = ssub.s32 %s13, 1
      %s19 = ssub.s32 %s13, 2
      %s26 = sadd.s32 1, %s21
      %p27 = scmp.ge.s32.totalorder %s26, 1
      %s28 = scalar_select %p27, 0, %s26
      %s29 = sadd.s32 1, %s20
      %s30 = scalar_select %p27, %s29, %s20
      %p31 = scmp.ge.s32.totalorder %s30, 2
      %s32 = scalar_select %p31, 0, %s30
      %s33 = ssub.s32 %s20, %s32
      %s34 = ssub.s32 %s21, %s28
      %s35 = sor.u32 %s33, %s34
      %p36 = scmp.eq.s32.totalorder %s35, 0
      %s38 = sadd.s32 %s37, 1
      %s39 = scalar_select %p36, %s37, %s38
      %p42 = pneg %p36
      %p43 = scmp.eq.s32.totalorder %s13, 1
      %p44 = por %p42, %p43
      %p45 = scmp.ne.s32.totalorder %s37, %s40
      %p46 = scmp.eq.s32.totalorder %s13, 0
      %p47 = por %p45, %p46
      %p48 = scmp.ne.s32.totalorder %s37, %s40
      %p49 = scmp.eq.s32.totalorder %s18, 1
      %p50 = por %p48, %p49
      %p51 = scmp.ne.s32.totalorder %s40, %s41
      %p52 = scmp.eq.s32.totalorder %s18, 0
      %p53 = por %p51, %p52
      %p54 = scmp.ne.s32.totalorder %s40, %s41
      %p55 = scmp.eq.s32.totalorder %s19, 1
      %p56 = por %p54, %p55
      %p58 = scmp.ne.s32.totalorder %s41, %s57
      %p59 = scmp.eq.s32.totalorder %s19, 0
      %p60 = por %p58, %p59
      %s61 = ssub.s32 %s20, %s32
      %s62 = ssub.s32 %s21, %s28
      %s63 = sor.u32 %s61, %s62
      %p64 = scmp.eq.s32.totalorder %s63, 0
      %s66 = sadd.s32 %s65, 1
      %s67 = scalar_select %p64, %s65, %s66
      %p70 = pneg %p64
      %p71 = scmp.eq.s32.totalorder %s13, 1
      %p72 = por %p70, %p71
      %p73 = scmp.ne.s32.totalorder %s65, %s68
      %p74 = scmp.eq.s32.totalorder %s13, 0
      %p75 = por %p73, %p74
      %p76 = scmp.ne.s32.totalorder %s65, %s68
      %p77 = scmp.eq.s32.totalorder %s18, 1
      %p78 = por %p76, %p77
      %p79 = scmp.ne.s32.totalorder %s68, %s69
      %p80 = scmp.eq.s32.totalorder %s18, 0
      %p81 = por %p79, %p80
      %p82 = scmp.ne.s32.totalorder %s68, %s69
      %p83 = scmp.eq.s32.totalorder %s19, 1
      %p84 = por %p82, %p83
      %p86 = scmp.ne.s32.totalorder %s69, %s85
      %p87 = scmp.eq.s32.totalorder %s19, 0
      %p88 = por %p86, %p87
      %s89 = ssub.s32 %s20, %s32
      %s90 = ssub.s32 %s21, %s28
      %s91 = sor.u32 %s89, %s90
      %p92 = scmp.eq.s32.totalorder %s91, 0
      %s94 = sadd.s32 %s93, 1
      %s95 = scalar_select %p92, %s93, %s94
      %p98 = pneg %p92
      %p99 = scmp.eq.s32.totalorder %s13, 1
      %p100 = por %p98, %p99
      %p101 = scmp.ne.s32.totalorder %s93, %s96
      %p102 = scmp.eq.s32.totalorder %s13, 0
      %p103 = por %p101, %p102
      %p104 = scmp.ne.s32.totalorder %s93, %s96
      %p105 = scmp.eq.s32.totalorder %s18, 1
      %p106 = por %p104, %p105
      %p107 = scmp.ne.s32.totalorder %s96, %s97
      %p108 = scmp.eq.s32.totalorder %s18, 0
      %p109 = por %p107, %p108
      %p110 = scmp.ne.s32.totalorder %s96, %s97
      %p111 = scmp.eq.s32.totalorder %s19, 1
      %p112 = por %p110, %p111
      %p114 = scmp.ne.s32.totalorder %s97, %s113
      %p115 = scmp.eq.s32.totalorder %s19, 0
      %p116 = por %p114, %p115
      %s117 = ssub.s32 %s20, %s32
      %s118 = ssub.s32 %s21, %s28
      %s119 = sor.u32 %s117, %s118
      %p120 = scmp.eq.s32.totalorder %s119, 0
      %s122 = sadd.s32 %s121, 1
      %s123 = scalar_select %p120, %s121, %s122
      %p126 = pneg %p120
      %p127 = scmp.eq.s32.totalorder %s13, 1
      %p128 = por %p126, %p127
      %p129 = scmp.ne.s32.totalorder %s121, %s124
      %p130 = scmp.eq.s32.totalorder %s13, 0
      %p131 = por %p129, %p130
      %p132 = scmp.ne.s32.totalorder %s121, %s124
      %p133 = scmp.eq.s32.totalorder %s18, 1
      %p134 = por %p132, %p133
      %p135 = scmp.ne.s32.totalorder %s124, %s125
      %p136 = scmp.eq.s32.totalorder %s18, 0
      %p137 = por %p135, %p136
      %p138 = scmp.ne.s32.totalorder %s124, %s125
      %p139 = scmp.eq.s32.totalorder %s19, 1
      %p140 = por %p138, %p139
      %p142 = scmp.ne.s32.totalorder %s125, %s141
      %p143 = scmp.eq.s32.totalorder %s19, 0
      %p144 = por %p142, %p143
      %p145 = scmp.le.s32.totalorder 1, %s13
      %p146 = scmp.lt.s32.totalorder %s13, 3
      %p147 = pnand %p145, %p146
      %p148 = pneg %p147
      // Predicated region
      $region9: #{_lambda_.1} parent=5 // pred_check
        _
      $region10: #{_lambda_.1} parent=5 // pred_check_branch
        %150 = sbr.rel (%p147) target = $region12
      $region11: #{_lambda_.1} parent=5 // pred_region
        %s151 = ssub.s32 %s13, 1
      $region12: #{_lambda_.1} parent=5 // pred_fallthru
        _
      %p152 = scmp.lt.s32.totalorder %s13, 2
      // Predicated region
      $region13: #{_lambda_.1} parent=5 // pred_check
        %p153 = pneg %p152
      $region14: #{_lambda_.1} parent=5 // pred_check_branch
        %155 = sbr.rel (%p153) target = $region16
      $region15: #{_lambda_.1} parent=5 // pred_region
        // Predicated region
        $region17: #{_lambda_.1} parent=15 // pred_check
          %p156 = pneg %p47
        $region18: #{_lambda_.1} parent=15 // pred_check_branch
          %158 = sbr.rel (%p156) target = $region20
        $region19: #{_lambda_.1} parent=15 // pred_region
          %s159 = sand.u32 %s37, 1
          %s160 = scalar_lea.sflag [#allocation3], %s159
          %s161 = sand.u32 %s37, 1
          %s162 = smul.addr %s161, 64
          %s163 = scalar_lea.vmem [#allocation2], %s162
          %s164 = smul.u32 4, %s21
          %s166 = ssub.s32 1024, 1024
          %167 = vsyncadd %s160, %s166
          %s168 = smul.addr %s164, 2
          %s169 = smul.addr %s20, 8
          %s170 = sadd.s32 %s168, %s169
          %s171 = smul.addr %s170, 128
          %s172 = scalar_lea.hbm %s0, %s171
          %s173 = sshll.u32 %s163, 4
          %s174 = int_to_ptr.vmem [resolvable:$true] %s173
          %179 = dma.hbm_to_vmem [thread:$0]  %s172, 1024, %s174, %s160, 128, 128, 8
        $region20: #{_lambda_.1} parent=15 // pred_fallthru
          _
      $region16: #{_lambda_.1} parent=5 // pred_fallthru
        _
      %p180 = scmp.le.s32.totalorder 1, %s13
      %p181 = scmp.lt.s32.totalorder %s13, 3
      %p182 = pnand %p180, %p181
      %p183 = pneg %p182
      // Predicated region
      $region21: #{_lambda_.1} parent=5 // pred_check
        _
      $region22: #{_lambda_.1} parent=5 // pred_check_branch
        %185 = sbr.rel (%p182) target = $region24
      $region23: #{_lambda_.1} parent=5 // pred_region
        %s186 = ssub.s32 %s13, 1
        %s187 = sand.u32 %s40, 1
        %s188 = scalar_lea.sflag [#allocation3], %s187
        %s189 = sand.u32 %s40, 1
        %s190 = smul.addr %s189, 64
        %s191 = scalar_lea.vmem [#allocation2], %s190
        // Predicated region
        $region25: #{_lambda_.1} parent=23 // pred_check
          %p192 = pneg %p53
        $region26: #{_lambda_.1} parent=23 // pred_check_branch
          %194 = sbr.rel (%p192) target = $region28
        $region27: #{_lambda_.1} parent=23 // pred_region
          %195 = dma.done %s188, 1024
        $region28: #{_lambda_.1} parent=23 // pred_fallthru
          _
        %s196 = sand.u32 %s40, 1
        %s197 = scalar_lea.sflag [#allocation3], %s196
        %s198 = sand.u32 %s40, 1
        %s199 = smul.addr %s198, 64
        %s200 = scalar_lea.vmem [#allocation2], %s199
        %p201 = pneg %p53
        %p202 = pneg %p50
        %p203 = pneg %p81
        %p204 = pneg %p78
        %p205 = scmp.lt.s32.totalorder %s22, 1
        %s206 = scalar_select %p205, %s22, 1
        %p207 = scmp.lt.s32.totalorder %s23, 0
        %s208 = scalar_select %p207, %s23, 0
        %s209 = sadd.s32 %s208, %s206
        %s210 = smul.addr %s209, 4
        %s211 = scalar_lea.vmem %s1, %s210
        %p212 = pneg %p109
        %p213 = pneg %p106
        %p214 = scmp.lt.s32.totalorder %s22, 1
        %s215 = scalar_select %p214, %s22, 1
        %p216 = scmp.lt.s32.totalorder %s23, 0
        %s217 = scalar_select %p216, %s23, 0
        %s218 = sadd.s32 %s217, %s215
        %s219 = smul.addr %s218, 4
        %s220 = scalar_lea.vmem %s2, %s219
        %p221 = pneg %p137
        %p222 = pneg %p134
        %p223 = scmp.lt.s32.totalorder %s22, 1
        %s224 = scalar_select %p223, %s22, 1
        %p225 = scmp.lt.s32.totalorder %s23, 0
        %s226 = scalar_select %p225, %s23, 0
        %s227 = sadd.s32 %s226, %s224
        %s228 = smul.addr %s227, 4
        %s229 = scalar_lea.vmem %s3, %s228
        %s230 = smul.u32 4, %s23
        %p231 = scmp.lt.s32.totalorder %s22, 1
        %s232 = scalar_select %p231, %s22, 1
        %p233 = scmp.lt.s32.totalorder %s23, 0
        %s234 = scalar_select %p233, %s23, 0
        %s235 = sadd.s32 %s234, %s232
        %s236 = smul.addr %s235, 4
        %s237 = scalar_lea.vmem %s1, %s236
        %p238 = scmp.lt.s32.totalorder %s22, 1
        %s239 = scalar_select %p238, %s22, 1
        %p240 = scmp.lt.s32.totalorder %s23, 0
        %s241 = scalar_select %p240, %s23, 0
        %s242 = sadd.s32 %s241, %s239
        %s243 = smul.addr %s242, 4
        %s244 = scalar_lea.vmem %s2, %s243
        %p245 = scmp.lt.s32.totalorder %s22, 1
        %s246 = scalar_select %p245, %s22, 1
        %p247 = scmp.lt.s32.totalorder %s23, 0
        %s248 = scalar_select %p247, %s23, 0
        %s249 = sadd.s32 %s248, %s246
        %s250 = smul.addr %s249, 4
        %s251 = scalar_lea.vmem %s3, %s250
        %v252 = vld [vmem:[%s191] sm:$0xff]
        %v253 = vld [vmem:[%s191 + $0x8] sm:$0xff]
        %v254 = vld [vmem:[%s191 + $0x10] sm:$0xff]
        %v255 = vld [vmem:[%s191 + $0x18] sm:$0xff]
        %v256 = vld [vmem:[%s191 + $0x20] sm:$0xff]
        %v257 = vld [vmem:[%s191 + $0x28] sm:$0xff]
        %v258 = vld [vmem:[%s191 + $0x30] sm:$0xff]
        %v259 = vld [vmem:[%s191 + $0x38] sm:$0xff]
        %vm260 = vcmask 130048
        %v261 = vsel %vm260, %v252, -inf
        %v262 = vsel %vm260, %v253, -inf
        %v263 = vmax.f32 %v261, %v262
        %v264 = vrot.slane %v263, 4
        %v265 = vmax.f32 %v263, %v264
        %v266 = vrot.slane %v265, 2
        %v267 = vmax.f32 %v265, %v266
        %v268 = vrot.slane %v267, 1
        %v269 = vmax.f32 %v267, %v268
        %v270 = vsel %vm260, %v254, -inf
        %v271 = vsel %vm260, %v255, -inf
        %v272 = vmax.f32 %v270, %v271
        %v273 = vrot.slane %v272, 4
        %v274 = vmax.f32 %v272, %v273
        %v275 = vrot.slane %v274, 2
        %v276 = vmax.f32 %v274, %v275
        %v277 = vrot.slane %v276, 1
        %v278 = vmax.f32 %v276, %v277
        %v279 = vsel %vm260, %v256, -inf
        %v280 = vsel %vm260, %v257, -inf
        %v281 = vmax.f32 %v279, %v280
        %v282 = vrot.slane %v281, 4
        %v283 = vmax.f32 %v281, %v282
        %v284 = vrot.slane %v283, 2
        %v285 = vmax.f32 %v283, %v284
        %v286 = vrot.slane %v285, 1
        %v287 = vmax.f32 %v285, %v286
        %v288 = vsel %vm260, %v258, -inf
        %v289 = vsel %vm260, %v259, -inf
        %v290 = vmax.f32 %v288, %v289
        %v291 = vrot.slane %v290, 4
        %v292 = vmax.f32 %v290, %v291
        %v293 = vrot.slane %v292, 2
        %v294 = vmax.f32 %v292, %v293
        %v295 = vrot.slane %v294, 1
        %v296 = vmax.f32 %v294, %v295
        %vm301 = vcmask 1041409
        %v302 = vsel %vm301, %v278, %v269
        %vm303 = vcmask 1042434
        %v304 = vsel %vm303, %v287, %v302
        %vm305 = vcmask 1043459
        %v306 = vsel %vm305, %v296, %v304
        %vm308 = vcmask 125952
        %v309 = vsel %vm308, %v306, -inf
        %310 = vmax.xlane.f32.xlu0 %v309
        %v311 = vpop.xlane.xlu0 %310
        %vm312 = vcmask 3072
        %313 = vst.msk [vmem:[%s237] sm:$0xf] %vm312, %v311
        %v314 = vld [vmem:[%s191] sm:$0xff]
        %v315 = vld [vmem:[%s191 + $0x10] sm:$0xff]
        %v316 = vld [vmem:[%s191 + $0x20] sm:$0xff]
        %v317 = vld [vmem:[%s191 + $0x30] sm:$0xff]
        %v318 = vsel %vm260, %v314, -inf
        %v319 = vrot.slane %v318, 4
        %v320 = vmax.f32 %v318, %v319
        %v321 = vrot.slane %v320, 2
        %v322 = vmax.f32 %v320, %v321
        %v323 = vrot.slane %v322, 1
        %v324 = vmax.f32 %v322, %v323
        %v325 = vsel %vm260, %v315, -inf
        %v326 = vrot.slane %v325, 4
        %v327 = vmax.f32 %v325, %v326
        %v328 = vrot.slane %v327, 2
        %v329 = vmax.f32 %v327, %v328
        %v330 = vrot.slane %v329, 1
        %v331 = vmax.f32 %v329, %v330
        %v332 = vsel %vm260, %v316, -inf
        %v333 = vrot.slane %v332, 4
        %v334 = vmax.f32 %v332, %v333
        %v335 = vrot.slane %v334, 2
        %v336 = vmax.f32 %v334, %v335
        %v337 = vrot.slane %v336, 1
        %v338 = vmax.f32 %v336, %v337
        %v339 = vsel %vm260, %v317, -inf
        %v340 = vrot.slane %v339, 4
        %v341 = vmax.f32 %v339, %v340
        %v342 = vrot.slane %v341, 2
        %v343 = vmax.f32 %v341, %v342
        %v344 = vrot.slane %v343, 1
        %v345 = vmax.f32 %v343, %v344
        %v350 = vsel %vm301, %v331, %v324
        %v351 = vsel %vm303, %v338, %v350
        %v352 = vsel %vm305, %v345, %v351
        %vm354 = vcmask 60416
        %v355 = vsel %vm354, %v352, -inf
        %356 = vmax.xlane.f32.xlu0 %v355
        %v357 = vpop.xlane.xlu0 %356
        %vm358 = vcmask 126016
        %v359 = vsel %vm358, %v352, -inf
        %360 = vmax.xlane.f32.xlu0 %v359
        %v361 = vpop.xlane.xlu0 %360
        %v362 = vld [vmem:[%s191 + $0x8] sm:$0xff]
        %v363 = vld [vmem:[%s191 + $0x18] sm:$0xff]
        %v364 = vld [vmem:[%s191 + $0x28] sm:$0xff]
        %v365 = vld [vmem:[%s191 + $0x38] sm:$0xff]
        %v366 = vsel %vm260, %v362, -inf
        %v367 = vrot.slane %v366, 4
        %v368 = vmax.f32 %v366, %v367
        %v369 = vrot.slane %v368, 2
        %v370 = vmax.f32 %v368, %v369
        %v371 = vrot.slane %v370, 1
        %v372 = vmax.f32 %v370, %v371
        %v373 = vsel %vm260, %v363, -inf
        %v374 = vrot.slane %v373, 4
        %v375 = vmax.f32 %v373, %v374
        %v376 = vrot.slane %v375, 2
        %v377 = vmax.f32 %v375, %v376
        %v378 = vrot.slane %v377, 1
        %v379 = vmax.f32 %v377, %v378
        %v380 = vsel %vm260, %v364, -inf
        %v381 = vrot.slane %v380, 4
        %v382 = vmax.f32 %v380, %v381
        %v383 = vrot.slane %v382, 2
        %v384 = vmax.f32 %v382, %v383
        %v385 = vrot.slane %v384, 1
        %v386 = vmax.f32 %v384, %v385
        %v387 = vsel %vm260, %v365, -inf
        %v388 = vrot.slane %v387, 4
        %v389 = vmax.f32 %v387, %v388
        %v390 = vrot.slane %v389, 2
        %v391 = vmax.f32 %v389, %v390
        %v392 = vrot.slane %v391, 1
        %v393 = vmax.f32 %v391, %v392
        %v398 = vsel %vm301, %v379, %v372
        %v399 = vsel %vm303, %v386, %v398
        %v400 = vsel %vm305, %v393, %v399
        %v402 = vsel %vm354, %v400, -inf
        %403 = vmax.xlane.f32.xlu0 %v402
        %v404 = vpop.xlane.xlu0 %403
        %v405 = vsel %vm358, %v400, -inf
        %406 = vmax.xlane.f32.xlu0 %v405
        %v407 = vpop.xlane.xlu0 %406
        %vm408 = vcmask 7168
        %v409 = vsel %vm408, %v357, %v361
        %vm410 = vcmask 15360
        %v411 = vsel %vm410, %v409, %v404
        %vm412 = vcmask 23552
        %v413 = vsel %vm412, %v411, %v407
        %vm414 = vcmask 27648
        %415 = vst.msk [vmem:[%s244] sm:$0xf] %vm414, %v413
        %v416 = vld [vmem:[%s191] sm:$0xf]
        %v417 = vld [vmem:[%s191 + $0x10] sm:$0xf]
        %v418 = vld [vmem:[%s191 + $0x20] sm:$0xf]
        %v419 = vld [vmem:[%s191 + $0x30] sm:$0xf]
        %v420 = vsel %vm308, %v416, -inf
        %v421 = vrot.slane %v420, 4
        %v422 = vmax.f32 %v420, %v421
        %v423 = vrot.slane %v422, 2
        %v424 = vmax.f32 %v422, %v423
        %v425 = vrot.slane %v424, 1
        %v426 = vmax.f32 %v424, %v425
        %v427 = vsel %vm308, %v417, -inf
        %v428 = vrot.slane %v427, 4
        %v429 = vmax.f32 %v427, %v428
        %v430 = vrot.slane %v429, 2
        %v431 = vmax.f32 %v429, %v430
        %v432 = vrot.slane %v431, 1
        %v433 = vmax.f32 %v431, %v432
        %v434 = vsel %vm308, %v418, -inf
        %v435 = vrot.slane %v434, 4
        %v436 = vmax.f32 %v434, %v435
        %v437 = vrot.slane %v436, 2
        %v438 = vmax.f32 %v436, %v437
        %v439 = vrot.slane %v438, 1
        %v440 = vmax.f32 %v438, %v439
        %v441 = vsel %vm308, %v419, -inf
        %v442 = vrot.slane %v441, 4
        %v443 = vmax.f32 %v441, %v442
        %v444 = vrot.slane %v443, 2
        %v445 = vmax.f32 %v443, %v444
        %v446 = vrot.slane %v445, 1
        %v447 = vmax.f32 %v445, %v446
        %v452 = vsel %vm301, %v433, %v426
        %v453 = vsel %vm303, %v440, %v452
        %v454 = vsel %vm305, %v447, %v453
        %v456 = vsel %vm414, %v454, -inf
        %457 = vmax.xlane.f32.xlu0 %v456
        %v458 = vpop.xlane.xlu0 %457
        %vm459 = vcmask 60448
        %v460 = vsel %vm459, %v454, -inf
        %461 = vmax.xlane.f32.xlu0 %v460
        %v462 = vpop.xlane.xlu0 %461
        %vm463 = vcmask 93248
        %v464 = vsel %vm463, %v454, -inf
        %465 = vmax.xlane.f32.xlu0 %v464
        %v466 = vpop.xlane.xlu0 %465
        %vm467 = vcmask 126048
        %v468 = vsel %vm467, %v454, -inf
        %469 = vmax.xlane.f32.xlu0 %v468
        %v470 = vpop.xlane.xlu0 %469
        %v471 = vld [vmem:[%s191 + $0x4] sm:$0xf]
        %v472 = vld [vmem:[%s191 + $0x14] sm:$0xf]
        %v473 = vld [vmem:[%s191 + $0x24] sm:$0xf]
        %v474 = vld [vmem:[%s191 + $0x34] sm:$0xf]
        %v475 = vsel %vm308, %v471, -inf
        %v476 = vrot.slane %v475, 4
        %v477 = vmax.f32 %v475, %v476
        %v478 = vrot.slane %v477, 2
        %v479 = vmax.f32 %v477, %v478
        %v480 = vrot.slane %v479, 1
        %v481 = vmax.f32 %v479, %v480
        %v482 = vsel %vm308, %v472, -inf
        %v483 = vrot.slane %v482, 4
        %v484 = vmax.f32 %v482, %v483
        %v485 = vrot.slane %v484, 2
        %v486 = vmax.f32 %v484, %v485
        %v487 = vrot.slane %v486, 1
        %v488 = vmax.f32 %v486, %v487
        %v489 = vsel %vm308, %v473, -inf
        %v490 = vrot.slane %v489, 4
        %v491 = vmax.f32 %v489, %v490
        %v492 = vrot.slane %v491, 2
        %v493 = vmax.f32 %v491, %v492
        %v494 = vrot.slane %v493, 1
        %v495 = vmax.f32 %v493, %v494
        %v496 = vsel %vm308, %v474, -inf
        %v497 = vrot.slane %v496, 4
        %v498 = vmax.f32 %v496, %v497
        %v499 = vrot.slane %v498, 2
        %v500 = vmax.f32 %v498, %v499
        %v501 = vrot.slane %v500, 1
        %v502 = vmax.f32 %v500, %v501
        %v507 = vsel %vm301, %v488, %v481
        %v508 = vsel %vm303, %v495, %v507
        %v509 = vsel %vm305, %v502, %v508
        %v511 = vsel %vm414, %v509, -inf
        %512 = vmax.xlane.f32.xlu0 %v511
        %v513 = vpop.xlane.xlu0 %512
        %v514 = vsel %vm459, %v509, -inf
        %515 = vmax.xlane.f32.xlu0 %v514
        %v516 = vpop.xlane.xlu0 %515
        %v517 = vsel %vm463, %v509, -inf
        %518 = vmax.xlane.f32.xlu0 %v517
        %v519 = vpop.xlane.xlu0 %518
        %v520 = vsel %vm467, %v509, -inf
        %521 = vmax.xlane.f32.xlu0 %v520
        %v522 = vpop.xlane.xlu0 %521
        %v523 = vld [vmem:[%s191 + $0x8] sm:$0xf]
        %v524 = vld [vmem:[%s191 + $0x18] sm:$0xf]
        %v525 = vld [vmem:[%s191 + $0x28] sm:$0xf]
        %v526 = vld [vmem:[%s191 + $0x38] sm:$0xf]
        %v527 = vsel %vm308, %v523, -inf
        %v528 = vrot.slane %v527, 4
        %v529 = vmax.f32 %v527, %v528
        %v530 = vrot.slane %v529, 2
        %v531 = vmax.f32 %v529, %v530
        %v532 = vrot.slane %v531, 1
        %v533 = vmax.f32 %v531, %v532
        %v534 = vsel %vm308, %v524, -inf
        %v535 = vrot.slane %v534, 4
        %v536 = vmax.f32 %v534, %v535
        %v537 = vrot.slane %v536, 2
        %v538 = vmax.f32 %v536, %v537
        %v539 = vrot.slane %v538, 1
        %v540 = vmax.f32 %v538, %v539
        %v541 = vsel %vm308, %v525, -inf
        %v542 = vrot.slane %v541, 4
        %v543 = vmax.f32 %v541, %v542
        %v544 = vrot.slane %v543, 2
        %v545 = vmax.f32 %v543, %v544
        %v546 = vrot.slane %v545, 1
        %v547 = vmax.f32 %v545, %v546
        %v548 = vsel %vm308, %v526, -inf
        %v549 = vrot.slane %v548, 4
        %v550 = vmax.f32 %v548, %v549
        %v551 = vrot.slane %v550, 2
        %v552 = vmax.f32 %v550, %v551
        %v553 = vrot.slane %v552, 1
        %v554 = vmax.f32 %v552, %v553
        %v559 = vsel %vm301, %v540, %v533
        %v560 = vsel %vm303, %v547, %v559
        %v561 = vsel %vm305, %v554, %v560
        %v563 = vsel %vm414, %v561, -inf
        %564 = vmax.xlane.f32.xlu0 %v563
        %v565 = vpop.xlane.xlu0 %564
        %v566 = vsel %vm459, %v561, -inf
        %567 = vmax.xlane.f32.xlu0 %v566
        %v568 = vpop.xlane.xlu0 %567
        %v569 = vsel %vm463, %v561, -inf
        %570 = vmax.xlane.f32.xlu0 %v569
        %v571 = vpop.xlane.xlu0 %570
        %v572 = vsel %vm467, %v561, -inf
        %573 = vmax.xlane.f32.xlu0 %v572
        %v574 = vpop.xlane.xlu0 %573
        %v575 = vld [vmem:[%s191 + $0xc] sm:$0xf]
        %v576 = vld [vmem:[%s191 + $0x1c] sm:$0xf]
        %v577 = vld [vmem:[%s191 + $0x2c] sm:$0xf]
        %v578 = vld [vmem:[%s191 + $0x3c] sm:$0xf]
        %v579 = vsel %vm308, %v575, -inf
        %v580 = vrot.slane %v579, 4
        %v581 = vmax.f32 %v579, %v580
        %v582 = vrot.slane %v581, 2
        %v583 = vmax.f32 %v581, %v582
        %v584 = vrot.slane %v583, 1
        %v585 = vmax.f32 %v583, %v584
        %v586 = vsel %vm308, %v576, -inf
        %v587 = vrot.slane %v586, 4
        %v588 = vmax.f32 %v586, %v587
        %v589 = vrot.slane %v588, 2
        %v590 = vmax.f32 %v588, %v589
        %v591 = vrot.slane %v590, 1
        %v592 = vmax.f32 %v590, %v591
        %v593 = vsel %vm308, %v577, -inf
        %v594 = vrot.slane %v593, 4
        %v595 = vmax.f32 %v593, %v594
        %v596 = vrot.slane %v595, 2
        %v597 = vmax.f32 %v595, %v596
        %v598 = vrot.slane %v597, 1
        %v599 = vmax.f32 %v597, %v598
        %v600 = vsel %vm308, %v578, -inf
        %v601 = vrot.slane %v600, 4
        %v602 = vmax.f32 %v600, %v601
        %v603 = vrot.slane %v602, 2
        %v604 = vmax.f32 %v602, %v603
        %v605 = vrot.slane %v604, 1
        %v606 = vmax.f32 %v604, %v605
        %v611 = vsel %vm301, %v592, %v585
        %v612 = vsel %vm303, %v599, %v611
        %v613 = vsel %vm305, %v606, %v612
        %v615 = vsel %vm414, %v613, -inf
        %616 = vmax.xlane.f32.xlu0 %v615
        %v617 = vpop.xlane.xlu0 %616
        %v618 = vsel %vm459, %v613, -inf
        %619 = vmax.xlane.f32.xlu0 %v618
        %v620 = vpop.xlane.xlu0 %619
        %v621 = vsel %vm463, %v613, -inf
        %622 = vmax.xlane.f32.xlu0 %v621
        %v623 = vpop.xlane.xlu0 %622
        %v624 = vsel %vm467, %v613, -inf
        %625 = vmax.xlane.f32.xlu0 %v624
        %v626 = vpop.xlane.xlu0 %625
        %v627 = vsel %vm408, %v458, %v462
        %v628 = vsel %vm410, %v627, %v466
        %v629 = vsel %vm412, %v628, %v470
        %vm630 = vcmask 31744
        %v631 = vsel %vm630, %v629, %v513
        %vm632 = vcmask 39936
        %v633 = vsel %vm632, %v631, %v516
        %vm634 = vcmask 48128
        %v635 = vsel %vm634, %v633, %v519
        %vm636 = vcmask 56320
        %v637 = vsel %vm636, %v635, %v522
        %vm638 = vcmask 64512
        %v639 = vsel %vm638, %v637, %v565
        %vm640 = vcmask 72704
        %v641 = vsel %vm640, %v639, %v568
        %vm642 = vcmask 80896
        %v643 = vsel %vm642, %v641, %v571
        %vm644 = vcmask 89088
        %v645 = vsel %vm644, %v643, %v574
        %vm646 = vcmask 97280
        %v647 = vsel %vm646, %v645, %v617
        %vm648 = vcmask 105472
        %v649 = vsel %vm648, %v647, %v620
        %vm650 = vcmask 113664
        %v651 = vsel %vm650, %v649, %v623
        %vm652 = vcmask 121856
        %v653 = vsel %vm652, %v651, %v626
        %654 = vst.msk [vmem:[%s251] sm:$0xf] %vm308, %v653
        %p655 = scmp.lt.s32.totalorder %s22, 1
        %s656 = scalar_select %p655, %s22, 1
        %p657 = scmp.lt.s32.totalorder %s23, 0
        %s658 = scalar_select %p657, %s23, 0
        %s659 = sadd.s32 %s658, %s656
        %s660 = smul.addr %s659, 4
        %s661 = scalar_lea.vmem %s1, %s660
        %p662 = scmp.lt.s32.totalorder %s22, 1
        %s663 = scalar_select %p662, %s22, 1
        %p664 = scmp.lt.s32.totalorder %s23, 0
        %s665 = scalar_select %p664, %s23, 0
        %s666 = sadd.s32 %s665, %s663
        %s667 = smul.addr %s666, 4
        %s668 = scalar_lea.vmem %s2, %s667
        %p669 = scmp.lt.s32.totalorder %s22, 1
        %s670 = scalar_select %p669, %s22, 1
        %p671 = scmp.lt.s32.totalorder %s23, 0
        %s672 = scalar_select %p671, %s23, 0
        %s673 = sadd.s32 %s672, %s670
        %s674 = smul.addr %s673, 4
        %s675 = scalar_lea.vmem %s3, %s674
        // Predicated region
        $region29: #{_lambda_.1} parent=23 // pred_check
          %p676 = pneg %p78
        $region30: #{_lambda_.1} parent=23 // pred_check_branch
          %678 = sbr.rel (%p676) target = $region32
        $region31: #{_lambda_.1} parent=23 // pred_region
          _
        $region32: #{_lambda_.1} parent=23 // pred_fallthru
          _
        // Predicated region
        $region33: #{_lambda_.1} parent=23 // pred_check
          %p679 = pneg %p106
        $region34: #{_lambda_.1} parent=23 // pred_check_branch
          %681 = sbr.rel (%p679) target = $region36
        $region35: #{_lambda_.1} parent=23 // pred_region
          _
        $region36: #{_lambda_.1} parent=23 // pred_fallthru
          _
        // Predicated region
        $region37: #{_lambda_.1} parent=23 // pred_check
          %p682 = pneg %p134
        $region38: #{_lambda_.1} parent=23 // pred_check_branch
          %684 = sbr.rel (%p682) target = $region40
        $region39: #{_lambda_.1} parent=23 // pred_region
          _
        $region40: #{_lambda_.1} parent=23 // pred_fallthru
          _
      $region24: #{_lambda_.1} parent=5 // pred_fallthru
        _
      %p685 = scmp.le.s32.totalorder 2, %s13
      // Predicated region
      $region41: #{_lambda_.1} parent=5 // pred_check
        %p686 = pneg %p685
      $region42: #{_lambda_.1} parent=5 // pred_check_branch
        %688 = sbr.rel (%p686) target = $region44
      $region43: #{_lambda_.1} parent=5 // pred_region
        %s689 = ssub.s32 %s13, 2
        // Predicated region
        $region45: #{_lambda_.1} parent=43 // pred_check
          %p690 = pneg %p84
        $region46: #{_lambda_.1} parent=43 // pred_check_branch
          %692 = sbr.rel (%p690) target = $region48
        $region47: #{_lambda_.1} parent=43 // pred_region
          %p693 = scmp.lt.s32.totalorder %s24, 1
          %s694 = scalar_select %p693, %s24, 1
          %p695 = scmp.lt.s32.totalorder %s25, 0
          %s696 = scalar_select %p695, %s25, 0
          %s697 = sadd.s32 %s696, %s694
          %s698 = smul.addr %s697, 4
          %s699 = scalar_lea.vmem %s1, %s698
        $region48: #{_lambda_.1} parent=43 // pred_fallthru
          _
        // Predicated region
        $region49: #{_lambda_.1} parent=43 // pred_check
          %p700 = pneg %p112
        $region50: #{_lambda_.1} parent=43 // pred_check_branch
          %702 = sbr.rel (%p700) target = $region52
        $region51: #{_lambda_.1} parent=43 // pred_region
          %p703 = scmp.lt.s32.totalorder %s24, 1
          %s704 = scalar_select %p703, %s24, 1
          %p705 = scmp.lt.s32.totalorder %s25, 0
          %s706 = scalar_select %p705, %s25, 0
          %s707 = sadd.s32 %s706, %s704
          %s708 = smul.addr %s707, 4
          %s709 = scalar_lea.vmem %s2, %s708
        $region52: #{_lambda_.1} parent=43 // pred_fallthru
          _
        // Predicated region
        $region53: #{_lambda_.1} parent=43 // pred_check
          %p710 = pneg %p140
        $region54: #{_lambda_.1} parent=43 // pred_check_branch
          %712 = sbr.rel (%p710) target = $region56
        $region55: #{_lambda_.1} parent=43 // pred_region
          %p713 = scmp.lt.s32.totalorder %s24, 1
          %s714 = scalar_select %p713, %s24, 1
          %p715 = scmp.lt.s32.totalorder %s25, 0
          %s716 = scalar_select %p715, %s25, 0
          %s717 = sadd.s32 %s716, %s714
          %s718 = smul.addr %s717, 4
          %s719 = scalar_lea.vmem %s3, %s718
        $region56: #{_lambda_.1} parent=43 // pred_fallthru
          _
      $region44: #{_lambda_.1} parent=5 // pred_fallthru
        _
    $region6: #{_lambda_.1} parent=1 // loop_footer
      %s17 = sadd.s32 1, %s13
    $region7: #{_lambda_.1} parent=1 // loop_footer_branch
      %12 = sbr.rel target = $region3
    $region8: #{_lambda_.1} parent=1 // loop_exit
      _
    %720 = vsyncpa [#allocation3], 1
    %s721 = scalar_lea.sflag [#allocation3], 1
    %722 = vsyncpa %s721, 1

</llo_original>
